<compile_context>
chip_gen: v6e
topology: v6e:2x2x1
jax: 0.10.0
libtpu: 0.0.40
codegen_flags: <defaults>
</compile_context>

<pallas_src>
import math
import functools

import jax
import jax.numpy as jnp
from jax.experimental import pallas as pl
from jax.experimental.pallas import tpu as pltpu


def _fused_bias_act_kernel(x_ref, b_ref, o_ref, *, act, alpha, gain):
    """Elementwise hot path: bias add + activation + gain, fused in VMEM."""
    x = x_ref[...]                              # (TM, TL), input dtype
    b = b_ref[...].astype(x.dtype)              # (TM, 1) f32 bias (lr_mult folded)
    xb = x + b                                  # broadcast along lanes
    if act == "lrelu":
        pos = jnp.asarray(gain, dtype=xb.dtype)
        neg = jnp.asarray(alpha * gain, dtype=xb.dtype)
        y = xb * jnp.where(xb >= 0, pos, neg)   # fused gain into the select
    elif act == "relu":
        y = jnp.maximum(xb, 0) * jnp.asarray(gain, dtype=xb.dtype)
    elif act == "linear":
        y = xb * jnp.asarray(gain, dtype=xb.dtype)
    else:
        raise ValueError(f"unsupported act: {act}")
    o_ref[...] = y.astype(o_ref.dtype)


def _choose_tiles(M, L, itemsize, target_bytes=2 * 1024 * 1024):
    """Pick (row_tile, lane_tile) so one block is ~target_bytes and legal."""
    # Lane tile: keep the full spatial extent unless a single 8-row stripe
    # already blows the budget (only possible for huge spatial sizes).
    if L % 128 == 0 and 8 * L * itemsize > target_bytes:
        tl = max(128, (target_bytes // (8 * itemsize)) // 128 * 128)
    else:
        tl = L
    rows = max(1, target_bytes // (tl * itemsize))
    tm = max(8, (rows // 8) * 8)                # multiple of 8
    if tm >= M:
        tm = M                                  # full extent is always legal
    return tm, tl


def fused_bias_activation(x, bias=None, *, act="lrelu", alpha=0.2,
                          gain=math.sqrt(2.0), lr_mult=1.0):
    """x: NCHW float array. bias: (C,) or None. Returns NCHW, same dtype as x."""
    N, C, H, W = x.shape
    M = N * C
    L = H * W
    itemsize = jnp.dtype(x.dtype).itemsize

    # Apply lr_mult in f32 (matches the reference/PyTorch precision), keep f32.
    if bias is None:
        b32 = jnp.zeros((C,), dtype=jnp.float32)
    else:
        b32 = bias.astype(jnp.float32) * jnp.float32(lr_mult)

    # Free reshape of NCHW: row r of x2d is (batch r//C, channel r%C).
    x2d = x.reshape(M, L)
    b_col = jnp.tile(b32, N).reshape(M, 1)      # tiny; bias for row r = b32[r % C]

    tm, tl = _choose_tiles(M, L, itemsize)
    grid = (pl.cdiv(M, tm), pl.cdiv(L, tl))

    kernel = functools.partial(_fused_bias_act_kernel,
                               act=act, alpha=float(alpha), gain=float(gain))

    cost = pl.CostEstimate(
        flops=3 * M * L,
        transcendentals=0,
        bytes_accessed=2 * M * L * itemsize + M * 4,
    )

    out2d = pl.pallas_call(
        kernel,
        out_shape=jax.ShapeDtypeStruct((M, L), x.dtype),
        grid_spec=pltpu.PrefetchScalarGridSpec(
            num_scalar_prefetch=0,
            grid=grid,
            in_specs=[
                pl.BlockSpec((tm, tl), lambda i, j: (i, j)),   # activation tile
                pl.BlockSpec((tm, 1), lambda i, j: (i, 0)),    # per-row bias column
            ],
            out_specs=pl.BlockSpec((tm, tl), lambda i, j: (i, j)),
        ),
        compiler_params=pltpu.CompilerParams(
            dimension_semantics=("parallel", "parallel"),
            vmem_limit_bytes=32 * 1024 * 1024,
        ),
        cost_estimate=cost,
    )(x2d, b_col)

    return out2d.reshape(N, C, H, W)


def _reference(x, bias, *, act, alpha, gain, lr_mult):
    b = (bias.astype(jnp.float32) * lr_mult).reshape(1, -1, 1, 1)
    y = x.astype(jnp.float32) + b
    if act == "lrelu":
        y = jnp.where(y >= 0.0, y, y * alpha)
    elif act == "relu":
        y = jnp.maximum(y, 0.0)
    return (y * gain).astype(x.dtype)


if __name__ == "__main__":
    # Module config: FusedBiasActivation(act='lrelu', alpha=0.2, gain=sqrt(2),
    #                                    bias=True, bias_dim=C, lr_mult=1.0)
    N, C, H, W = 2, 4, 16, 16
    act, alpha, gain, lr_mult = "lrelu", 0.2, math.sqrt(2.0), 1.0

    key = jax.random.PRNGKey(0)
    kx, kb = jax.random.split(key)
    x = jax.random.normal(kx, (N, C, H, W), dtype=jnp.float32)
    # reset_parameters() zeros the bias; use a small deterministic non-zero
    # bias so the bias-add path is actually exercised.
    bias = 0.1 * jax.random.normal(kb, (C,), dtype=jnp.float32)

    out = fused_bias_activation(x, bias, act=act, alpha=alpha,
                                gain=gain, lr_mult=lr_mult)
    out = jax.block_until_ready(out)

    ref = _reference(x, bias, act=act, alpha=alpha, gain=gain, lr_mult=lr_mult)
    assert out.shape == (N, C, H, W) and out.dtype == x.dtype
    assert jnp.allclose(out, ref, atol=1e-5, rtol=1e-5)

    print("KERNEL_OK")
</pallas_src>

<mosaic_0001>
module attributes {stable_mosaic.version = 11 : i64} {
  func.func @_fused_bias_act_kernel(%arg0: i32, %arg1: i32, %arg2: memref<8x256xf32, #tpu.memory_space<vmem>>, %arg3: memref<8x1xf32, #tpu.memory_space<vmem>>, %arg4: memref<8x256xf32, #tpu.memory_space<vmem>>) attributes {dimension_semantics = [#tpu.dimension_semantics<parallel>, #tpu.dimension_semantics<parallel>], iteration_bounds = array<i64: 1, 1>, scalar_prefetch = 0 : i64, scratch_operands = 0 : i64, tpu.core_type = #tpu.core_type<tc>, window_params = [{transform_indices = @transform_0, window_bounds = array<i64: 8, 256>}, {transform_indices = @transform_1, window_bounds = array<i64: 8, 1>}, {transform_indices = @transform_2, window_bounds = array<i64: 8, 256>}]} {
    %c0 = arith.constant 0 : index
    %c0_0 = arith.constant 0 : index
    %0 = vector.load %arg2[%c0, %c0_0] : memref<8x256xf32, #tpu.memory_space<vmem>>, vector<8x256xf32>
    %c0_1 = arith.constant 0 : index
    %c0_2 = arith.constant 0 : index
    %1 = vector.load %arg3[%c0_1, %c0_2] : memref<8x1xf32, #tpu.memory_space<vmem>>, vector<8x1xf32>
    %2 = vector.broadcast %1 : vector<8x1xf32> to vector<8x256xf32>
    %3 = arith.addf %0, %2 : vector<8x256xf32>
    %cst = arith.constant 0.000000e+00 : f32
    %4 = vector.broadcast %cst : f32 to vector<8x256xf32>
    %5 = arith.cmpf oge, %3, %4 : vector<8x256xf32>
    %cst_3 = arith.constant 1.41421354 : f32
    %cst_4 = arith.constant 0.282842726 : f32
    %6 = vector.broadcast %cst_3 : f32 to vector<8x256xf32>
    %7 = vector.broadcast %cst_4 : f32 to vector<8x256xf32>
    %8 = arith.select %5, %6, %7 : vector<8x256xi1>, vector<8x256xf32>
    %9 = arith.mulf %3, %8 : vector<8x256xf32>
    %c0_5 = arith.constant 0 : index
    %c0_6 = arith.constant 0 : index
    %10 = vector.load %arg4[%c0_5, %c0_6] : memref<8x256xf32, #tpu.memory_space<vmem>>, vector<8x256xf32>
    tpu.vector_store %arg4[%c0_5, %c0_6], %9 {strides = array<i32>} : memref<8x256xf32, #tpu.memory_space<vmem>>, vector<8x256xf32>,
    return
  }
  func.func @transform_0(%arg0: i32, %arg1: i32) -> (i32, i32) {
    %c0_i32 = arith.constant 0 : i32
    return %arg0, %arg1 : i32, i32
  }
  func.func @transform_1(%arg0: i32, %arg1: i32) -> (i32, i32) {
    %c0_i32 = arith.constant 0 : i32
    %c0_i32_0 = arith.constant 0 : i32
    return %arg0, %c0_i32 : i32, i32
  }
  func.func @transform_2(%arg0: i32, %arg1: i32) -> (i32, i32) {
    %c0_i32 = arith.constant 0 : i32
    return %arg0, %arg1 : i32, i32
  }
}

</mosaic_0001>

<llo_original>
// kernel: tpu_custom_call.1
$region0: #{tpu_custom_call.1}
  #allocation0 [shape = 'u32[]', space=smem, size = 0x4, offset = 0x4, fixed_abs, tag = 'smem constant byte address 0x4 - core index']
  #allocation1 [shape = 'u32[144,128]{1,0:T(1,128)}', space=vmem, size = 0x12000, scoped, tag = 'internal scratch']
  %s0 = inlined_call_operand.hbm [shape: f32[8,256], index: 0, kind: input, shape index: {}]
  %s1 = inlined_call_operand.vmem [shape: f32[8,1], index: 1, kind: input, shape index: {}]
  %s2 = inlined_call_operand.hbm [shape: f32[8,256], index: 2, kind: output, shape index: {}]
  %s3 = sld [smem:[#allocation0]]
  $region22: #{tpu_custom_call.1} parent=0
    _
  %s5 = ssub.s32 1, %s3
  %s6 = scalar_select 0, %s5, %s3
  $region1: #{tpu_custom_call.1} parent=0
    #allocation2 [shape = 'u8[8192]{0}', space=vmem, size = 0x2000, scoped, tag = 'input window, operand 0, single buffered']
    #allocation3 [shape = 's32[1]{0}', space=sflag, size = 0x4, scoped, tag = 'scoped memory for tpu_custom_call.1']
    #allocation4 [shape = 's32[1]{0}', space=sflag, size = 0x4, scoped, tag = 'scoped memory for tpu_custom_call.1']
    #allocation5 [shape = 'u8[8192]{0}', space=vmem, size = 0x2000, scoped, tag = 'output window, operand 0, single buffered']
    %7 = vsyncpa [#allocation3], 0
    %8 = vsyncpa [#allocation4], 0
    // Predicated region
    $region2: #{tpu_custom_call.1} parent=1 // pred_check
      _
    $region3: #{tpu_custom_call.1} parent=1 // pred_check_branch
      %10 = sbr.rel (0) target = $region5
    $region4: #{tpu_custom_call.1} parent=1 // pred_region
      %s12 = ssub.s32 256, 256
      %13 = vsyncadd [#allocation3], %s12
      %s15 = sshll.u32 [#allocation2], 4
      %s16 = int_to_ptr.vmem [resolvable:$true] %s15
      %18 = dma.hbm_to_vmem [thread:$0]  %s0, 256, %s16, [#allocation3]
    $region5: #{tpu_custom_call.1} parent=1 // pred_fallthru
      _
    // Predicated region
    $region6: #{tpu_custom_call.1} parent=1 // pred_check
      _
    $region7: #{tpu_custom_call.1} parent=1 // pred_check_branch
      %20 = sbr.rel (0) target = $region9
    $region8: #{tpu_custom_call.1} parent=1 // pred_region
      _
    $region9: #{tpu_custom_call.1} parent=1 // pred_fallthru
      _
    // Predicated region
    $region10: #{tpu_custom_call.1} parent=1 // pred_check
      _
    $region11: #{tpu_custom_call.1} parent=1 // pred_check_branch
      %22 = sbr.rel (0) target = $region13
    $region12: #{tpu_custom_call.1} parent=1 // pred_region
      %23 = dma.done [#allocation3], 256
    $region13: #{tpu_custom_call.1} parent=1 // pred_fallthru
      _
    %v24 = vld [vmem:[#allocation2] sm:$0xff]
    %v25 = vld [vmem:[#allocation2 + $0x8] sm:$0xff]
    %v26 = vld [vmem:[%s1] sm:$0xff]
    %28 = vset.pattern.permute.xlu0 0
    %29 = vperm.xlu0 %28, %v26
    %v30 = vpop.permute.xlu0 %29
    %v32 = vadd.f32 %v24, %v30
    %v33 = vadd.f32 %v25, %v30
    %vm34 = vcmp.ge.f32.partialorder %v32, 0.0
    %vm35 = vcmp.ge.f32.partialorder %v33, 0.0
    %v36 = vsel %vm34, 1.4142135, 0.28284273
    %v37 = vsel %vm35, 1.4142135, 0.28284273
    %v38 = vmul.f32 %v32, %v36
    %v39 = vmul.f32 %v33, %v37
    %40 = vst [vmem:[#allocation5] sm:$0xff] %v38
    %41 = vst [vmem:[#allocation5 + $0x8] sm:$0xff] %v39
    // Predicated region
    $region14: #{tpu_custom_call.1} parent=1 // pred_check
      _
    $region15: #{tpu_custom_call.1} parent=1 // pred_check_branch
      %43 = sbr.rel (0) target = $region17
    $region16: #{tpu_custom_call.1} parent=1 // pred_region
      %s45 = ssub.s32 256, 256
      %46 = vsyncadd [#allocation4], %s45
      %s48 = sshll.u32 [#allocation5], 4
      %s49 = int_to_ptr.vmem [resolvable:$true] %s48
      %51 = dma.vmem_to_hbm [thread:$0]  %s49, 256, %s2, [#allocation4]
    $region17: #{tpu_custom_call.1} parent=1 // pred_fallthru
      _
    // Predicated region
    $region18: #{tpu_custom_call.1} parent=1 // pred_check
      _
    $region19: #{tpu_custom_call.1} parent=1 // pred_check_branch
      %53 = sbr.rel (0) target = $region21
    $region20: #{tpu_custom_call.1} parent=1 // pred_region
      %54 = dma.done [#allocation4], 256
    $region21: #{tpu_custom_call.1} parent=1 // pred_fallthru
      _
    %55 = vsyncpa [#allocation3], 1
    %56 = vsyncpa [#allocation4], 1

</llo_original>
